<compile_context>
chip_gen: v5e
topology: v5e:2x2
jax: 0.10.0
libtpu: 0.0.40
codegen_flags: <defaults>
</compile_context>

<pallas_src>
import jax
import jax.numpy as jnp
from jax.experimental import pallas as pl
from jax.experimental.pallas import tpu as pltpu

INPUT_DIM = 11
K_PAD = 16          # padded contraction dim for layer 1
NET_WIDTH = 256


def _round_up(n, m):
    return ((n + m - 1) // m) * m


def _mlp_kernel(x_ref, w1_ref, b1_ref, w2_ref, b2_ref, w3_ref, b3_ref, o_ref):
    # Layer 1: (tb, 16) @ (16, 256) + (1, 256), ReLU   (f32 accumulation)
    h = jnp.dot(x_ref[...], w1_ref[...], preferred_element_type=jnp.float32)
    h = jnp.maximum(h + b1_ref[...], 0.0)
    # Layer 2: (tb, 256) @ (256, 256) + (1, 256), ReLU
    h = jnp.dot(h.astype(w2_ref.dtype), w2_ref[...],
                preferred_element_type=jnp.float32)
    h = jnp.maximum(h + b2_ref[...], 0.0)
    # Layer 3: (tb, 256) @ (256, 256) + (1, 256), ReLU
    h = jnp.dot(h.astype(w3_ref.dtype), w3_ref[...],
                preferred_element_type=jnp.float32)
    h = jnp.maximum(h + b3_ref[...], 0.0)
    o_ref[...] = h.astype(o_ref.dtype)


def fixed_branch_forward(x, params, *, tile_b=256, use_bf16=False):
    """FixedBranch forward pass.  x: (B, INPUT_DIM) float32 -> (B, 256) f32."""
    w1, b1, w2, b2, w3, b3 = params
    B, D = x.shape
    assert D == INPUT_DIM

    # --- Wrapper-side layout prep (all cheap, done once per call) ----------
    # Zero-pad the layer-1 contraction dim (11 -> 16); result is unchanged
    # because the padded x columns multiply padded-zero rows of w1.
    x_p = jnp.pad(x, ((0, 0), (0, K_PAD - D))).astype(jnp.float32)
    w1_p = jnp.pad(w1, ((0, K_PAD - D), (0, 0)))

    # Batch tile: multiple of 8 (sublane), at most `tile_b`, and never larger
    # than the (padded) batch.  Pad the batch so it divides evenly; slice off
    # the padding at the end.
    tb = min(_round_up(tile_b, 8), _round_up(B, 8))
    B_pad = _round_up(B, tb)
    if B_pad != B:
        x_p = jnp.pad(x_p, ((0, B_pad - B), (0, 0)))

    # Optional bf16 matmul inputs (f32 accumulation stays in the kernel).
    if use_bf16:
        x_p = x_p.astype(jnp.bfloat16)
        w1_p = w1_p.astype(jnp.bfloat16)
        w2 = w2.astype(jnp.bfloat16)
        w3 = w3.astype(jnp.bfloat16)
    b1 = b1.astype(jnp.float32)
    b2 = b2.astype(jnp.float32)
    b3 = b3.astype(jnp.float32)

    grid = (B_pad // tb,)

    # Weights/biases are tiny (<1 MiB total); only the batch dim is tiled.
    in_specs = [
        pl.BlockSpec((tb, K_PAD), lambda i: (i, 0)),            # x tile
        pl.BlockSpec((K_PAD, NET_WIDTH), lambda i: (0, 0)),      # w1
        pl.BlockSpec((1, NET_WIDTH), lambda i: (0, 0)),          # b1
        pl.BlockSpec((NET_WIDTH, NET_WIDTH), lambda i: (0, 0)),  # w2
        pl.BlockSpec((1, NET_WIDTH), lambda i: (0, 0)),          # b2
        pl.BlockSpec((NET_WIDTH, NET_WIDTH), lambda i: (0, 0)),  # w3
        pl.BlockSpec((1, NET_WIDTH), lambda i: (0, 0)),          # b3
    ]
    out_spec = pl.BlockSpec((tb, NET_WIDTH), lambda i: (i, 0))

    out = pl.pallas_call(
        _mlp_kernel,
        out_shape=jax.ShapeDtypeStruct((B_pad, NET_WIDTH), jnp.float32),
        grid_spec=pltpu.PrefetchScalarGridSpec(
            num_scalar_prefetch=0,
            grid=grid,
            in_specs=in_specs,
            out_specs=out_spec,
        ),
        compiler_params=pltpu.CompilerParams(
            dimension_semantics=("parallel",)),
    )(x_p, w1_p, b1, w2, b2, w3, b3)

    return out[:B]


def init_params(key):
    """Deterministic synthetic parameter init (shapes match nn.Linear)."""
    k1, k2, k3, k4, k5, k6 = jax.random.split(key, 6)
    # nn.Linear default init: U(-1/sqrt(fan_in), 1/sqrt(fan_in))
    s1 = 1.0 / jnp.sqrt(INPUT_DIM)
    s2 = 1.0 / jnp.sqrt(NET_WIDTH)
    w1 = jax.random.uniform(k1, (INPUT_DIM, NET_WIDTH), jnp.float32, -s1, s1)
    b1 = jax.random.uniform(k2, (1, NET_WIDTH), jnp.float32, -s1, s1)
    w2 = jax.random.uniform(k3, (NET_WIDTH, NET_WIDTH), jnp.float32, -s2, s2)
    b2 = jax.random.uniform(k4, (1, NET_WIDTH), jnp.float32, -s2, s2)
    w3 = jax.random.uniform(k5, (NET_WIDTH, NET_WIDTH), jnp.float32, -s2, s2)
    b3 = jax.random.uniform(k6, (1, NET_WIDTH), jnp.float32, -s2, s2)
    return (w1, b1, w2, b2, w3, b3)


def reference_forward(x, params):
    w1, b1, w2, b2, w3, b3 = params
    h = jnp.maximum(x @ w1 + b1, 0.0)
    h = jnp.maximum(h @ w2 + b2, 0.0)
    h = jnp.maximum(h @ w3 + b3, 0.0)
    return h


if __name__ == "__main__":
    key = jax.random.PRNGKey(0)
    kx, kp, kx2 = jax.random.split(key, 3)
    params = init_params(kp)

    # Small primary test (single grid step; padded batch path unused).
    B = 16
    x = jax.random.normal(kx, (B, INPUT_DIM), jnp.float32)
    out = jax.block_until_ready(fixed_branch_forward(x, params))
    ref = reference_forward(x, params)
    assert out.shape == (B, NET_WIDTH)
    assert jnp.allclose(out, ref, atol=1e-5, rtol=1e-5)

    # Exercise multi-step grid + batch padding/slicing (B not multiple of tile).
    B2 = 130
    x2 = jax.random.normal(kx2, (B2, INPUT_DIM), jnp.float32)
    out2 = jax.block_until_ready(fixed_branch_forward(x2, params, tile_b=64))
    ref2 = reference_forward(x2, params)
    assert out2.shape == (B2, NET_WIDTH)
    assert jnp.allclose(out2, ref2, atol=1e-5, rtol=1e-5)

    # bf16 fast path (f32 accumulation) — looser tolerance.
    out_bf16 = jax.block_until_ready(
        fixed_branch_forward(x2, params, tile_b=64, use_bf16=True))
    assert jnp.allclose(out_bf16, ref2, atol=5e-2, rtol=5e-2)

    print("KERNEL_OK")
</pallas_src>

<mosaic_0001>
module attributes {stable_mosaic.version = 11 : i64} {
  func.func @_mlp_kernel(%arg0: i32, %arg1: memref<16x16xf32, #tpu.memory_space<vmem>>, %arg2: memref<16x256xf32, #tpu.memory_space<vmem>>, %arg3: memref<1x256xf32, #tpu.memory_space<vmem>>, %arg4: memref<256x256xf32, #tpu.memory_space<vmem>>, %arg5: memref<1x256xf32, #tpu.memory_space<vmem>>, %arg6: memref<256x256xf32, #tpu.memory_space<vmem>>, %arg7: memref<1x256xf32, #tpu.memory_space<vmem>>, %arg8: memref<16x256xf32, #tpu.memory_space<vmem>>) attributes {dimension_semantics = [#tpu.dimension_semantics<parallel>], iteration_bounds = array<i64: 1>, scalar_prefetch = 0 : i64, scratch_operands = 0 : i64, tpu.core_type = #tpu.core_type<tc>, window_params = [{transform_indices = @transform_0, window_bounds = array<i64: 16, 16>}, {pipeline_mode = #tpu.pipeline_mode<synchronous>, transform_indices = @transform_1, window_bounds = array<i64: 16, 256>}, {pipeline_mode = #tpu.pipeline_mode<synchronous>, transform_indices = @transform_2, window_bounds = array<i64: 1, 256>}, {pipeline_mode = #tpu.pipeline_mode<synchronous>, transform_indices = @transform_3, window_bounds = array<i64: 256, 256>}, {pipeline_mode = #tpu.pipeline_mode<synchronous>, transform_indices = @transform_4, window_bounds = array<i64: 1, 256>}, {pipeline_mode = #tpu.pipeline_mode<synchronous>, transform_indices = @transform_5, window_bounds = array<i64: 256, 256>}, {pipeline_mode = #tpu.pipeline_mode<synchronous>, transform_indices = @transform_6, window_bounds = array<i64: 1, 256>}, {transform_indices = @transform_7, window_bounds = array<i64: 16, 256>}]} {
    %c0 = arith.constant 0 : index
    %c0_0 = arith.constant 0 : index
    %0 = vector.load %arg1[%c0, %c0_0] : memref<16x16xf32, #tpu.memory_space<vmem>>, vector<16x16xf32>
    %c0_1 = arith.constant 0 : index
    %c0_2 = arith.constant 0 : index
    %1 = vector.load %arg2[%c0_1, %c0_2] : memref<16x256xf32, #tpu.memory_space<vmem>>, vector<16x256xf32>
    %cst = arith.constant dense<0.000000e+00> : vector<16x256xf32>
    %2 = tpu.matmul %0, %1, %cst {dimension_numbers = #tpu.dot_dimension_numbers<[1], [0], [0], [1], [0, 0, 1, 1], [], []>} : vector<16x16xf32>, vector<16x256xf32>, vector<16x256xf32> -> vector<16x256xf32>
    %c0_3 = arith.constant 0 : index
    %c0_4 = arith.constant 0 : index
    %3 = vector.load %arg3[%c0_3, %c0_4] : memref<1x256xf32, #tpu.memory_space<vmem>>, vector<1x256xf32>
    %4 = vector.broadcast %3 : vector<1x256xf32> to vector<16x256xf32>
    %5 = arith.addf %2, %4 : vector<16x256xf32>
    %cst_5 = arith.constant 0.000000e+00 : f32
    %6 = vector.broadcast %cst_5 : f32 to vector<16x256xf32>
    %7 = arith.maximumf %5, %6 : vector<16x256xf32>
    %c0_6 = arith.constant 0 : index
    %c0_7 = arith.constant 0 : index
    %8 = vector.load %arg4[%c0_6, %c0_7] : memref<256x256xf32, #tpu.memory_space<vmem>>, vector<256x256xf32>
    %cst_8 = arith.constant dense<0.000000e+00> : vector<16x256xf32>
    %9 = tpu.matmul %7, %8, %cst_8 {dimension_numbers = #tpu.dot_dimension_numbers<[1], [0], [0], [1], [0, 0, 1, 1], [], []>} : vector<16x256xf32>, vector<256x256xf32>, vector<16x256xf32> -> vector<16x256xf32>
    %c0_9 = arith.constant 0 : index
    %c0_10 = arith.constant 0 : index
    %10 = vector.load %arg5[%c0_9, %c0_10] : memref<1x256xf32, #tpu.memory_space<vmem>>, vector<1x256xf32>
    %11 = vector.broadcast %10 : vector<1x256xf32> to vector<16x256xf32>
    %12 = arith.addf %9, %11 : vector<16x256xf32>
    %cst_11 = arith.constant 0.000000e+00 : f32
    %13 = vector.broadcast %cst_11 : f32 to vector<16x256xf32>
    %14 = arith.maximumf %12, %13 : vector<16x256xf32>
    %c0_12 = arith.constant 0 : index
    %c0_13 = arith.constant 0 : index
    %15 = vector.load %arg6[%c0_12, %c0_13] : memref<256x256xf32, #tpu.memory_space<vmem>>, vector<256x256xf32>
    %cst_14 = arith.constant dense<0.000000e+00> : vector<16x256xf32>
    %16 = tpu.matmul %14, %15, %cst_14 {dimension_numbers = #tpu.dot_dimension_numbers<[1], [0], [0], [1], [0, 0, 1, 1], [], []>} : vector<16x256xf32>, vector<256x256xf32>, vector<16x256xf32> -> vector<16x256xf32>
    %c0_15 = arith.constant 0 : index
    %c0_16 = arith.constant 0 : index
    %17 = vector.load %arg7[%c0_15, %c0_16] : memref<1x256xf32, #tpu.memory_space<vmem>>, vector<1x256xf32>
    %18 = vector.broadcast %17 : vector<1x256xf32> to vector<16x256xf32>
    %19 = arith.addf %16, %18 : vector<16x256xf32>
    %cst_17 = arith.constant 0.000000e+00 : f32
    %20 = vector.broadcast %cst_17 : f32 to vector<16x256xf32>
    %21 = arith.maximumf %19, %20 : vector<16x256xf32>
    %c0_18 = arith.constant 0 : index
    %c0_19 = arith.constant 0 : index
    %22 = vector.load %arg8[%c0_18, %c0_19] : memref<16x256xf32, #tpu.memory_space<vmem>>, vector<16x256xf32>
    tpu.vector_store %arg8[%c0_18, %c0_19], %21 {strides = array<i32>} : memref<16x256xf32, #tpu.memory_space<vmem>>, vector<16x256xf32>,
    return
  }
  func.func @transform_0(%arg0: i32) -> (i32, i32) {
    %c0_i32 = arith.constant 0 : i32
    %c0_i32_0 = arith.constant 0 : i32
    return %arg0, %c0_i32 : i32, i32
  }
  func.func @transform_1(%arg0: i32) -> (i32, i32) {
    %c0_i32 = arith.constant 0 : i32
    %c0_i32_0 = arith.constant 0 : i32
    %c0_i32_1 = arith.constant 0 : i32
    return %c0_i32, %c0_i32_0 : i32, i32
  }
  func.func @transform_2(%arg0: i32) -> (i32, i32) {
    %c0_i32 = arith.constant 0 : i32
    %c0_i32_0 = arith.constant 0 : i32
    %c0_i32_1 = arith.constant 0 : i32
    return %c0_i32, %c0_i32_0 : i32, i32
  }
  func.func @transform_3(%arg0: i32) -> (i32, i32) {
    %c0_i32 = arith.constant 0 : i32
    %c0_i32_0 = arith.constant 0 : i32
    %c0_i32_1 = arith.constant 0 : i32
    return %c0_i32, %c0_i32_0 : i32, i32
  }
  func.func @transform_4(%arg0: i32) -> (i32, i32) {
    %c0_i32 = arith.constant 0 : i32
    %c0_i32_0 = arith.constant 0 : i32
    %c0_i32_1 = arith.constant 0 : i32
    return %c0_i32, %c0_i32_0 : i32, i32
  }
  func.func @transform_5(%arg0: i32) -> (i32, i32) {
    %c0_i32 = arith.constant 0 : i32
    %c0_i32_0 = arith.constant 0 : i32
    %c0_i32_1 = arith.constant 0 : i32
    return %c0_i32, %c0_i32_0 : i32, i32
  }
  func.func @transform_6(%arg0: i32) -> (i32, i32) {
    %c0_i32 = arith.constant 0 : i32
    %c0_i32_0 = arith.constant 0 : i32
    %c0_i32_1 = arith.constant 0 : i32
    return %c0_i32, %c0_i32_0 : i32, i32
  }
  func.func @transform_7(%arg0: i32) -> (i32, i32) {
    %c0_i32 = arith.constant 0 : i32
    %c0_i32_0 = arith.constant 0 : i32
    return %arg0, %c0_i32 : i32, i32
  }
}

</mosaic_0001>

<llo_original>
// kernel: tpu_custom_call.1
$region0: #{tpu_custom_call.1}
  #allocation0 [shape = 'u32[]', space=smem, size = 0x4, offset = 0x4, fixed_abs, tag = 'smem constant byte address 0x4 - core index']
  #allocation1 [shape = 'u32[72,128]{1,0:T(1,128)}', space=vmem, size = 0x9000, scoped, tag = 'internal scratch']
  %s0 = inlined_call_operand.hbm [shape: f32[16,16], index: 0, kind: input, shape index: {}]
  %s1 = inlined_call_operand.hbm [shape: f32[16,256], index: 1, kind: input, shape index: {}]
  %s2 = inlined_call_operand.hbm [shape: f32[1,256], index: 2, kind: input, shape index: {}]
  %s3 = inlined_call_operand.hbm [shape: f32[256,256], index: 3, kind: input, shape index: {}]
  %s4 = inlined_call_operand.vmem [shape: f32[1,256], index: 4, kind: input, shape index: {}]
  %s5 = inlined_call_operand.hbm [shape: f32[256,256], index: 5, kind: input, shape index: {}]
  %s6 = inlined_call_operand.vmem [shape: f32[1,256], index: 6, kind: input, shape index: {}]
  %s7 = inlined_call_operand.hbm [shape: f32[16,256], index: 7, kind: output, shape index: {}]
  %s8 = sld [smem:[#allocation0]]
  $region58: #{tpu_custom_call.1} parent=0
    _
  %s10 = ssub.s32 1, %s8
  %s11 = scalar_select 0, %s10, %s8
  $region1: #{tpu_custom_call.1} parent=0
    #allocation2 [shape = 'u8[8192]{0}', space=vmem, size = 0x2000, scoped, tag = 'input window, operand 0, single buffered']
    #allocation3 [shape = 's32[1]{0}', space=sflag, size = 0x4, scoped, tag = 'scoped memory for tpu_custom_call.1']
    #allocation4 [shape = 's32[1]{0}', space=sflag, size = 0x4, scoped, tag = 'scoped memory for tpu_custom_call.1']
    #allocation5 [shape = 'u8[16384]{0}', space=vmem, size = 0x4000, scoped, tag = 'input window, operand 1, single buffered']
    #allocation6 [shape = 's32[1]{0}', space=sflag, size = 0x4, scoped, tag = 'scoped memory for tpu_custom_call.1']
    #allocation7 [shape = 'u8[1024]{0}', space=vmem, size = 0x400, scoped, tag = 'input window, operand 2, single buffered']
    #allocation8 [shape = 'u8[262144]{0}', space=vmem, size = 0x40000, scoped, tag = 'input window, operand 3, single buffered']
    #allocation9 [shape = 's32[1]{0}', space=sflag, size = 0x4, scoped, tag = 'scoped memory for tpu_custom_call.1']
    #allocation10 [shape = 'u8[262144]{0}', space=vmem, size = 0x40000, scoped, tag = 'input window, operand 5, single buffered']
    #allocation11 [shape = 'u8[16384]{0}', space=vmem, size = 0x4000, scoped, tag = 'output window, operand 0, single buffered']
    %12 = vsyncpa [#allocation3], 0
    %13 = vsyncpa [#allocation6], 0
    %14 = vsyncpa [#allocation9], 0
    %15 = vsyncpa [#allocation4], 0
    // Predicated region
    $region2: #{tpu_custom_call.1} parent=1 // pred_check
      _
    $region3: #{tpu_custom_call.1} parent=1 // pred_check_branch
      %17 = sbr.rel (0) target = $region5
    $region4: #{tpu_custom_call.1} parent=1 // pred_region
      %19 = vsyncadd [#allocation3], 0
      %s20 = sshll.u32 %s0, 4
      %s21 = int_to_ptr.hbm [resolvable:$true] %s20
      %s22 = sshll.u32 [#allocation2], 4
      %s23 = int_to_ptr.vmem [resolvable:$true] %s22
      %28 = dma.hbm_to_vmem [thread:$0]  %s21, 256, %s23, [#allocation3], 128, 128, 8
    $region5: #{tpu_custom_call.1} parent=1 // pred_fallthru
      _
    // Predicated region
    $region6: #{tpu_custom_call.1} parent=1 // pred_check
      _
    $region7: #{tpu_custom_call.1} parent=1 // pred_check_branch
      %30 = sbr.rel (0) target = $region9
    $region8: #{tpu_custom_call.1} parent=1 // pred_region
      %32 = vsyncadd [#allocation6], 0
      %s33 = sshll.u32 %s1, 4
      %s34 = int_to_ptr.hbm [resolvable:$true] %s33
      %s35 = sshll.u32 [#allocation5], 4
      %s36 = int_to_ptr.vmem [resolvable:$true] %s35
      %41 = dma.hbm_to_vmem [thread:$0]  %s34, 512, %s36, [#allocation6], 256, 256, 16
    $region9: #{tpu_custom_call.1} parent=1 // pred_fallthru
      _
    // Predicated region
    $region10: #{tpu_custom_call.1} parent=1 // pred_check
      _
    $region11: #{tpu_custom_call.1} parent=1 // pred_check_branch
      %43 = sbr.rel (0) target = $region13
    $region12: #{tpu_custom_call.1} parent=1 // pred_region
      %45 = vsyncadd [#allocation6], 0
      %s47 = sshll.u32 %s2, 4
      %s48 = int_to_ptr.hbm [resolvable:$true] %s47
      %s49 = sshll.u32 [#allocation7], 4
      %s50 = int_to_ptr.vmem [resolvable:$true] %s49
      %52 = dma.hbm_to_vmem [thread:$0]  %s48, 32, %s50, [#allocation6]
    $region13: #{tpu_custom_call.1} parent=1 // pred_fallthru
      _
    // Predicated region
    $region14: #{tpu_custom_call.1} parent=1 // pred_check
      _
    $region15: #{tpu_custom_call.1} parent=1 // pred_check_branch
      %54 = sbr.rel (0) target = $region17
    $region16: #{tpu_custom_call.1} parent=1 // pred_region
      %56 = vsyncadd [#allocation9], 0
      %s57 = sshll.u32 %s3, 4
      %s58 = int_to_ptr.hbm [resolvable:$true] %s57
      %s59 = sshll.u32 [#allocation8], 4
      %s60 = int_to_ptr.vmem [resolvable:$true] %s59
      %65 = dma.hbm_to_vmem [thread:$0]  %s58, 8192, %s60, [#allocation9], 256, 256, 16
    $region17: #{tpu_custom_call.1} parent=1 // pred_fallthru
      _
    // Predicated region
    $region18: #{tpu_custom_call.1} parent=1 // pred_check
      _
    $region19: #{tpu_custom_call.1} parent=1 // pred_check_branch
      %67 = sbr.rel (0) target = $region21
    $region20: #{tpu_custom_call.1} parent=1 // pred_region
      _
    $region21: #{tpu_custom_call.1} parent=1 // pred_fallthru
      _
    // Predicated region
    $region22: #{tpu_custom_call.1} parent=1 // pred_check
      _
    $region23: #{tpu_custom_call.1} parent=1 // pred_check_branch
      %69 = sbr.rel (0) target = $region25
    $region24: #{tpu_custom_call.1} parent=1 // pred_region
      %71 = vsyncadd [#allocation9], 0
      %s72 = sshll.u32 %s5, 4
      %s73 = int_to_ptr.hbm [resolvable:$true] %s72
      %s74 = sshll.u32 [#allocation10], 4
      %s75 = int_to_ptr.vmem [resolvable:$true] %s74
      %80 = dma.hbm_to_vmem [thread:$0]  %s73, 8192, %s75, [#allocation9], 256, 256, 16
    $region25: #{tpu_custom_call.1} parent=1 // pred_fallthru
      _
    // Predicated region
    $region26: #{tpu_custom_call.1} parent=1 // pred_check
      _
    $region27: #{tpu_custom_call.1} parent=1 // pred_check_branch
      %82 = sbr.rel (0) target = $region29
    $region28: #{tpu_custom_call.1} parent=1 // pred_region
      _
    $region29: #{tpu_custom_call.1} parent=1 // pred_fallthru
      _
    // Predicated region
    $region30: #{tpu_custom_call.1} parent=1 // pred_check
      _
    $region31: #{tpu_custom_call.1} parent=1 // pred_check_branch
      %84 = sbr.rel (0) target = $region33
    $region32: #{tpu_custom_call.1} parent=1 // pred_region
      %86 = dma.done [#allocation3], 256
    $region33: #{tpu_custom_call.1} parent=1 // pred_fallthru
      _
    // Predicated region
    $region34: #{tpu_custom_call.1} parent=1 // pred_check
      _
    $region35: #{tpu_custom_call.1} parent=1 // pred_check_branch
      %88 = sbr.rel (0) target = $region37
    $region36: #{tpu_custom_call.1} parent=1 // pred_region
      %90 = dma.done [#allocation6], 512
    $region37: #{tpu_custom_call.1} parent=1 // pred_fallthru
      _
    // Predicated region
    $region38: #{tpu_custom_call.1} parent=1 // pred_check
      _
    $region39: #{tpu_custom_call.1} parent=1 // pred_check_branch
      %92 = sbr.rel (0) target = $region41
    $region40: #{tpu_custom_call.1} parent=1 // pred_region
      %94 = dma.done [#allocation6], 32
    $region41: #{tpu_custom_call.1} parent=1 // pred_fallthru
      _
    // Predicated region
    $region42: #{tpu_custom_call.1} parent=1 // pred_check
      _
    $region43: #{tpu_custom_call.1} parent=1 // pred_check_branch
      %96 = sbr.rel (0) target = $region45
    $region44: #{tpu_custom_call.1} parent=1 // pred_region
      %98 = dma.done [#allocation9], 8192
    $region45: #{tpu_custom_call.1} parent=1 // pred_fallthru
      _
    // Predicated region
    $region46: #{tpu_custom_call.1} parent=1 // pred_check
      _
    $region47: #{tpu_custom_call.1} parent=1 // pred_check_branch
      %100 = sbr.rel (0) target = $region49
    $region48: #{tpu_custom_call.1} parent=1 // pred_region
      %102 = dma.done [#allocation9], 8192
    $region49: #{tpu_custom_call.1} parent=1 // pred_fallthru
      _
    %v103 = vld [vmem:[#allocation2] sm:$0xff]
    %v104 = vld [vmem:[#allocation2 + $0x8] sm:$0xff]
    %v105 = vld [vmem:[#allocation5] sm:$0xff]
    %v106 = vld [vmem:[#allocation5 + $0x8] sm:$0xff]
    %v107 = vld [vmem:[#allocation5 + $0x10] sm:$0xff]
    %v108 = vld [vmem:[#allocation5 + $0x18] sm:$0xff]
    %v109 = vld [vmem:[#allocation7] sm:$0x3]
    %v111 = vperm.slane %v109, 0
    %v112 = vperm.slane %v109, 1
    %vm115 = vcmask 130048
    %v117 = vsel %vm115, %v103, 0
    %v120 = vsel %vm115, %v104, 0
    %122 = vmatpush.msra.mxu0 0.0
    %123 = vmatpush.msra.mxu0 0.0
    %124 = vmatpush.msra.mxu0 0.0
    %125 = vmatpush.msra.mxu0 0.0
    %126 = vmatpush.msra.mxu0 0.0
    %127 = vmatpush.msra.mxu0 0.0
    %128 = vmatpush.msra.mxu0 0.0
    %129 = vmatpush.msra.mxu0 0.0
    %130 = vmatpush.msra.mxu0 0.0
    %131 = vmatpush.msra.mxu0 0.0
    %132 = vmatpush.msra.mxu0 0.0
    %133 = vmatpush.msra.mxu0 0.0
    %134 = vmatpush.msra.mxu0 0.0
    %135 = vmatpush.msra.mxu0 0.0
    %136 = vmatpush.msra.mxu0 %v107
    %137 = vmatpush.msra.mxu0 %v105
    %138 = vmatmul.f32.gmra.mxu0 %v117
    %v139 = vpop.f32.mrf.mxu0
    %v140 = vadd.f32 %v111, %v139
    %141 = vmatmul.f32.gmra.mxu0 %v120
    %v142 = vpop.f32.mrf.mxu0
    %v143 = vadd.f32 %v111, %v142
    %144 = vdwg.mxu0
    %145 = vmatpush.msra.mxu0 0.0
    %146 = vmatpush.msra.mxu0 0.0
    %147 = vmatpush.msra.mxu0 0.0
    %148 = vmatpush.msra.mxu0 0.0
    %149 = vmatpush.msra.mxu0 0.0
    %150 = vmatpush.msra.mxu0 0.0
    %151 = vmatpush.msra.mxu0 0.0
    %152 = vmatpush.msra.mxu0 0.0
    %153 = vmatpush.msra.mxu0 0.0
    %154 = vmatpush.msra.mxu0 0.0
    %155 = vmatpush.msra.mxu0 0.0
    %156 = vmatpush.msra.mxu0 0.0
    %157 = vmatpush.msra.mxu0 0.0
    %158 = vmatpush.msra.mxu0 0.0
    %159 = vmatpush.msra.mxu0 %v108
    %160 = vmatpush.msra.mxu0 %v106
    %161 = vmatmul.f32.gmra.mxu0 %v117
    %v162 = vpop.f32.mrf.mxu0
    %v163 = vadd.f32 %v112, %v162
    %164 = vmatmul.f32.gmra.mxu0 %v120
    %v165 = vpop.f32.mrf.mxu0
    %v166 = vadd.f32 %v112, %v165
    %167 = vdwg.mxu0
    %v168 = vmax.f32 %v140, 0.0
    %v169 = vmax.f32 %v163, 0.0
    %v170 = vmax.f32 %v143, 0.0
    %v171 = vmax.f32 %v166, 0.0
    %v172 = vld [vmem:[#allocation8] sm:$0xff]
    %v173 = vld [vmem:[#allocation8 + $0x8] sm:$0xff]
    %v174 = vld [vmem:[#allocation8 + $0x10] sm:$0xff]
    %v175 = vld [vmem:[#allocation8 + $0x18] sm:$0xff]
    %v176 = vld [vmem:[#allocation8 + $0x20] sm:$0xff]
    %v177 = vld [vmem:[#allocation8 + $0x28] sm:$0xff]
    %v178 = vld [vmem:[#allocation8 + $0x30] sm:$0xff]
    %v179 = vld [vmem:[#allocation8 + $0x38] sm:$0xff]
    %v180 = vld [vmem:[#allocation8 + $0x40] sm:$0xff]
    %v181 = vld [vmem:[#allocation8 + $0x48] sm:$0xff]
    %v182 = vld [vmem:[#allocation8 + $0x50] sm:$0xff]
    %v183 = vld [vmem:[#allocation8 + $0x58] sm:$0xff]
    %v184 = vld [vmem:[#allocation8 + $0x60] sm:$0xff]
    %v185 = vld [vmem:[#allocation8 + $0x68] sm:$0xff]
    %v186 = vld [vmem:[#allocation8 + $0x70] sm:$0xff]
    %v187 = vld [vmem:[#allocation8 + $0x78] sm:$0xff]
    %v188 = vld [vmem:[#allocation8 + $0x80] sm:$0xff]
    %v189 = vld [vmem:[#allocation8 + $0x88] sm:$0xff]
    %v190 = vld [vmem:[#allocation8 + $0x90] sm:$0xff]
    %v191 = vld [vmem:[#allocation8 + $0x98] sm:$0xff]
    %v192 = vld [vmem:[#allocation8 + $0xa0] sm:$0xff]
    %v193 = vld [vmem:[#allocation8 + $0xa8] sm:$0xff]
    %v194 = vld [vmem:[#allocation8 + $0xb0] sm:$0xff]
    %v195 = vld [vmem:[#allocation8 + $0xb8] sm:$0xff]
    %v196 = vld [vmem:[#allocation8 + $0xc0] sm:$0xff]
    %v197 = vld [vmem:[#allocation8 + $0xc8] sm:$0xff]
    %v198 = vld [vmem:[#allocation8 + $0xd0] sm:$0xff]
    %v199 = vld [vmem:[#allocation8 + $0xd8] sm:$0xff]
    %v200 = vld [vmem:[#allocation8 + $0xe0] sm:$0xff]
    %v201 = vld [vmem:[#allocation8 + $0xe8] sm:$0xff]
    %v202 = vld [vmem:[#allocation8 + $0xf0] sm:$0xff]
    %v203 = vld [vmem:[#allocation8 + $0xf8] sm:$0xff]
    %v204 = vld [vmem:[#allocation8 + $0x100] sm:$0xff]
    %v205 = vld [vmem:[#allocation8 + $0x108] sm:$0xff]
    %v206 = vld [vmem:[#allocation8 + $0x110] sm:$0xff]
    %v207 = vld [vmem:[#allocation8 + $0x118] sm:$0xff]
    %v208 = vld [vmem:[#allocation8 + $0x120] sm:$0xff]
    %v209 = vld [vmem:[#allocation8 + $0x128] sm:$0xff]
    %v210 = vld [vmem:[#allocation8 + $0x130] sm:$0xff]
    %v211 = vld [vmem:[#allocation8 + $0x138] sm:$0xff]
    %v212 = vld [vmem:[#allocation8 + $0x140] sm:$0xff]
    %v213 = vld [vmem:[#allocation8 + $0x148] sm:$0xff]
    %v214 = vld [vmem:[#allocation8 + $0x150] sm:$0xff]
    %v215 = vld [vmem:[#allocation8 + $0x158] sm:$0xff]
    %v216 = vld [vmem:[#allocation8 + $0x160] sm:$0xff]
    %v217 = vld [vmem:[#allocation8 + $0x168] sm:$0xff]
    %v218 = vld [vmem:[#allocation8 + $0x170] sm:$0xff]
    %v219 = vld [vmem:[#allocation8 + $0x178] sm:$0xff]
    %v220 = vld [vmem:[#allocation8 + $0x180] sm:$0xff]
    %v221 = vld [vmem:[#allocation8 + $0x188] sm:$0xff]
    %v222 = vld [vmem:[#allocation8 + $0x190] sm:$0xff]
    %v223 = vld [vmem:[#allocation8 + $0x198] sm:$0xff]
    %v224 = vld [vmem:[#allocation8 + $0x1a0] sm:$0xff]
    %v225 = vld [vmem:[#allocation8 + $0x1a8] sm:$0xff]
    %v226 = vld [vmem:[#allocation8 + $0x1b0] sm:$0xff]
    %v227 = vld [vmem:[#allocation8 + $0x1b8] sm:$0xff]
    %v228 = vld [vmem:[#allocation8 + $0x1c0] sm:$0xff]
    %v229 = vld [vmem:[#allocation8 + $0x1c8] sm:$0xff]
    %v230 = vld [vmem:[#allocation8 + $0x1d0] sm:$0xff]
    %v231 = vld [vmem:[#allocation8 + $0x1d8] sm:$0xff]
    %v232 = vld [vmem:[#allocation8 + $0x1e0] sm:$0xff]
    %v233 = vld [vmem:[#allocation8 + $0x1e8] sm:$0xff]
    %v234 = vld [vmem:[#allocation8 + $0x1f0] sm:$0xff]
    %v235 = vld [vmem:[#allocation8 + $0x1f8] sm:$0xff]
    %v236 = vld [vmem:[%s4] sm:$0x3]
    %v238 = vperm.slane %v236, 0
    %v239 = vperm.slane %v236, 1
    %242 = vmatpush.msra.mxu0 %v202
    %243 = vmatpush.msra.mxu0 %v200
    %244 = vmatpush.msra.mxu0 %v198
    %245 = vmatpush.msra.mxu0 %v196
    %246 = vmatpush.msra.mxu0 %v194
    %247 = vmatpush.msra.mxu0 %v192
    %248 = vmatpush.msra.mxu0 %v190
    %249 = vmatpush.msra.mxu0 %v188
    %250 = vmatpush.msra.mxu0 %v186
    %251 = vmatpush.msra.mxu0 %v184
    %252 = vmatpush.msra.mxu0 %v182
    %253 = vmatpush.msra.mxu0 %v180
    %254 = vmatpush.msra.mxu0 %v178
    %255 = vmatpush.msra.mxu0 %v176
    %256 = vmatpush.msra.mxu0 %v174
    %257 = vmatpush.msra.mxu0 %v172
    %258 = vmatmul.f32.gmra.mxu0 %v168
    %v259 = vpop.f32.mrf.mxu0
    %v260 = vadd.f32 %v238, %v259
    %261 = vmatmul.f32.gmra.mxu0 %v170
    %v262 = vpop.f32.mrf.mxu0
    %v263 = vadd.f32 %v238, %v262
    %264 = vdwg.mxu0
    %265 = vmatpush.msra.mxu0 %v234
    %266 = vmatpush.msra.mxu0 %v232
    %267 = vmatpush.msra.mxu0 %v230
    %268 = vmatpush.msra.mxu0 %v228
    %269 = vmatpush.msra.mxu0 %v226
    %270 = vmatpush.msra.mxu0 %v224
    %271 = vmatpush.msra.mxu0 %v222
    %272 = vmatpush.msra.mxu0 %v220
    %273 = vmatpush.msra.mxu0 %v218
    %274 = vmatpush.msra.mxu0 %v216
    %275 = vmatpush.msra.mxu0 %v214
    %276 = vmatpush.msra.mxu0 %v212
    %277 = vmatpush.msra.mxu0 %v210
    %278 = vmatpush.msra.mxu0 %v208
    %279 = vmatpush.msra.mxu0 %v206
    %280 = vmatpush.msra.mxu0 %v204
    %281 = vmatmul.f32.gmra.mxu0 %v169
    %v282 = vpop.f32.mrf.mxu0
    %v283 = vadd.f32 %v260, %v282
    %284 = vmatmul.f32.gmra.mxu0 %v171
    %v285 = vpop.f32.mrf.mxu0
    %v286 = vadd.f32 %v263, %v285
    %287 = vdwg.mxu0
    %288 = vmatpush.msra.mxu0 %v203
    %289 = vmatpush.msra.mxu0 %v201
    %290 = vmatpush.msra.mxu0 %v199
    %291 = vmatpush.msra.mxu0 %v197
    %292 = vmatpush.msra.mxu0 %v195
    %293 = vmatpush.msra.mxu0 %v193
    %294 = vmatpush.msra.mxu0 %v191
    %295 = vmatpush.msra.mxu0 %v189
    %296 = vmatpush.msra.mxu0 %v187
    %297 = vmatpush.msra.mxu0 %v185
    %298 = vmatpush.msra.mxu0 %v183
    %299 = vmatpush.msra.mxu0 %v181
    %300 = vmatpush.msra.mxu0 %v179
    %301 = vmatpush.msra.mxu0 %v177
    %302 = vmatpush.msra.mxu0 %v175
    %303 = vmatpush.msra.mxu0 %v173
    %304 = vmatmul.f32.gmra.mxu0 %v168
    %v305 = vpop.f32.mrf.mxu0
    %v306 = vadd.f32 %v239, %v305
    %307 = vmatmul.f32.gmra.mxu0 %v170
    %v308 = vpop.f32.mrf.mxu0
    %v309 = vadd.f32 %v239, %v308
    %310 = vdwg.mxu0
    %311 = vmatpush.msra.mxu0 %v235
    %312 = vmatpush.msra.mxu0 %v233
    %313 = vmatpush.msra.mxu0 %v231
    %314 = vmatpush.msra.mxu0 %v229
    %315 = vmatpush.msra.mxu0 %v227
    %316 = vmatpush.msra.mxu0 %v225
    %317 = vmatpush.msra.mxu0 %v223
    %318 = vmatpush.msra.mxu0 %v221
    %319 = vmatpush.msra.mxu0 %v219
    %320 = vmatpush.msra.mxu0 %v217
    %321 = vmatpush.msra.mxu0 %v215
    %322 = vmatpush.msra.mxu0 %v213
    %323 = vmatpush.msra.mxu0 %v211
    %324 = vmatpush.msra.mxu0 %v209
    %325 = vmatpush.msra.mxu0 %v207
    %326 = vmatpush.msra.mxu0 %v205
    %327 = vmatmul.f32.gmra.mxu0 %v169
    %v328 = vpop.f32.mrf.mxu0
    %v329 = vadd.f32 %v306, %v328
    %330 = vmatmul.f32.gmra.mxu0 %v171
    %v331 = vpop.f32.mrf.mxu0
    %v332 = vadd.f32 %v309, %v331
    %333 = vdwg.mxu0
    %v334 = vmax.f32 %v283, 0.0
    %v335 = vmax.f32 %v329, 0.0
    %v336 = vmax.f32 %v286, 0.0
    %v337 = vmax.f32 %v332, 0.0
    %v338 = vld [vmem:[#allocation10] sm:$0xff]
    %v339 = vld [vmem:[#allocation10 + $0x8] sm:$0xff]
    %v340 = vld [vmem:[#allocation10 + $0x10] sm:$0xff]
    %v341 = vld [vmem:[#allocation10 + $0x18] sm:$0xff]
    %v342 = vld [vmem:[#allocation10 + $0x20] sm:$0xff]
    %v343 = vld [vmem:[#allocation10 + $0x28] sm:$0xff]
    %v344 = vld [vmem:[#allocation10 + $0x30] sm:$0xff]
    %v345 = vld [vmem:[#allocation10 + $0x38] sm:$0xff]
    %v346 = vld [vmem:[#allocation10 + $0x40] sm:$0xff]
    %v347 = vld [vmem:[#allocation10 + $0x48] sm:$0xff]
    %v348 = vld [vmem:[#allocation10 + $0x50] sm:$0xff]
    %v349 = vld [vmem:[#allocation10 + $0x58] sm:$0xff]
    %v350 = vld [vmem:[#allocation10 + $0x60] sm:$0xff]
    %v351 = vld [vmem:[#allocation10 + $0x68] sm:$0xff]
    %v352 = vld [vmem:[#allocation10 + $0x70] sm:$0xff]
    %v353 = vld [vmem:[#allocation10 + $0x78] sm:$0xff]
    %v354 = vld [vmem:[#allocation10 + $0x80] sm:$0xff]
    %v355 = vld [vmem:[#allocation10 + $0x88] sm:$0xff]
    %v356 = vld [vmem:[#allocation10 + $0x90] sm:$0xff]
    %v357 = vld [vmem:[#allocation10 + $0x98] sm:$0xff]
    %v358 = vld [vmem:[#allocation10 + $0xa0] sm:$0xff]
    %v359 = vld [vmem:[#allocation10 + $0xa8] sm:$0xff]
    %v360 = vld [vmem:[#allocation10 + $0xb0] sm:$0xff]
    %v361 = vld [vmem:[#allocation10 + $0xb8] sm:$0xff]
    %v362 = vld [vmem:[#allocation10 + $0xc0] sm:$0xff]
    %v363 = vld [vmem:[#allocation10 + $0xc8] sm:$0xff]
    %v364 = vld [vmem:[#allocation10 + $0xd0] sm:$0xff]
    %v365 = vld [vmem:[#allocation10 + $0xd8] sm:$0xff]
    %v366 = vld [vmem:[#allocation10 + $0xe0] sm:$0xff]
    %v367 = vld [vmem:[#allocation10 + $0xe8] sm:$0xff]
    %v368 = vld [vmem:[#allocation10 + $0xf0] sm:$0xff]
    %v369 = vld [vmem:[#allocation10 + $0xf8] sm:$0xff]
    %v370 = vld [vmem:[#allocation10 + $0x100] sm:$0xff]
    %v371 = vld [vmem:[#allocation10 + $0x108] sm:$0xff]
    %v372 = vld [vmem:[#allocation10 + $0x110] sm:$0xff]
    %v373 = vld [vmem:[#allocation10 + $0x118] sm:$0xff]
    %v374 = vld [vmem:[#allocation10 + $0x120] sm:$0xff]
    %v375 = vld [vmem:[#allocation10 + $0x128] sm:$0xff]
    %v376 = vld [vmem:[#allocation10 + $0x130] sm:$0xff]
    %v377 = vld [vmem:[#allocation10 + $0x138] sm:$0xff]
    %v378 = vld [vmem:[#allocation10 + $0x140] sm:$0xff]
    %v379 = vld [vmem:[#allocation10 + $0x148] sm:$0xff]
    %v380 = vld [vmem:[#allocation10 + $0x150] sm:$0xff]
    %v381 = vld [vmem:[#allocation10 + $0x158] sm:$0xff]
    %v382 = vld [vmem:[#allocation10 + $0x160] sm:$0xff]
    %v383 = vld [vmem:[#allocation10 + $0x168] sm:$0xff]
    %v384 = vld [vmem:[#allocation10 + $0x170] sm:$0xff]
    %v385 = vld [vmem:[#allocation10 + $0x178] sm:$0xff]
    %v386 = vld [vmem:[#allocation10 + $0x180] sm:$0xff]
    %v387 = vld [vmem:[#allocation10 + $0x188] sm:$0xff]
    %v388 = vld [vmem:[#allocation10 + $0x190] sm:$0xff]
    %v389 = vld [vmem:[#allocation10 + $0x198] sm:$0xff]
    %v390 = vld [vmem:[#allocation10 + $0x1a0] sm:$0xff]
    %v391 = vld [vmem:[#allocation10 + $0x1a8] sm:$0xff]
    %v392 = vld [vmem:[#allocation10 + $0x1b0] sm:$0xff]
    %v393 = vld [vmem:[#allocation10 + $0x1b8] sm:$0xff]
    %v394 = vld [vmem:[#allocation10 + $0x1c0] sm:$0xff]
    %v395 = vld [vmem:[#allocation10 + $0x1c8] sm:$0xff]
    %v396 = vld [vmem:[#allocation10 + $0x1d0] sm:$0xff]
    %v397 = vld [vmem:[#allocation10 + $0x1d8] sm:$0xff]
    %v398 = vld [vmem:[#allocation10 + $0x1e0] sm:$0xff]
    %v399 = vld [vmem:[#allocation10 + $0x1e8] sm:$0xff]
    %v400 = vld [vmem:[#allocation10 + $0x1f0] sm:$0xff]
    %v401 = vld [vmem:[#allocation10 + $0x1f8] sm:$0xff]
    %v402 = vld [vmem:[%s6] sm:$0x3]
    %v404 = vperm.slane %v402, 0
    %v405 = vperm.slane %v402, 1
    %408 = vmatpush.msra.mxu0 %v368
    %409 = vmatpush.msra.mxu0 %v366
    %410 = vmatpush.msra.mxu0 %v364
    %411 = vmatpush.msra.mxu0 %v362
    %412 = vmatpush.msra.mxu0 %v360
    %413 = vmatpush.msra.mxu0 %v358
    %414 = vmatpush.msra.mxu0 %v356
    %415 = vmatpush.msra.mxu0 %v354
    %416 = vmatpush.msra.mxu0 %v352
    %417 = vmatpush.msra.mxu0 %v350
    %418 = vmatpush.msra.mxu0 %v348
    %419 = vmatpush.msra.mxu0 %v346
    %420 = vmatpush.msra.mxu0 %v344
    %421 = vmatpush.msra.mxu0 %v342
    %422 = vmatpush.msra.mxu0 %v340
    %423 = vmatpush.msra.mxu0 %v338
    %424 = vmatmul.f32.gmra.mxu0 %v334
    %v425 = vpop.f32.mrf.mxu0
    %v426 = vadd.f32 %v404, %v425
    %427 = vmatmul.f32.gmra.mxu0 %v336
    %v428 = vpop.f32.mrf.mxu0
    %v429 = vadd.f32 %v404, %v428
    %430 = vdwg.mxu0
    %431 = vmatpush.msra.mxu0 %v400
    %432 = vmatpush.msra.mxu0 %v398
    %433 = vmatpush.msra.mxu0 %v396
    %434 = vmatpush.msra.mxu0 %v394
    %435 = vmatpush.msra.mxu0 %v392
    %436 = vmatpush.msra.mxu0 %v390
    %437 = vmatpush.msra.mxu0 %v388
    %438 = vmatpush.msra.mxu0 %v386
    %439 = vmatpush.msra.mxu0 %v384
    %440 = vmatpush.msra.mxu0 %v382
    %441 = vmatpush.msra.mxu0 %v380
    %442 = vmatpush.msra.mxu0 %v378
    %443 = vmatpush.msra.mxu0 %v376
    %444 = vmatpush.msra.mxu0 %v374
    %445 = vmatpush.msra.mxu0 %v372
    %446 = vmatpush.msra.mxu0 %v370
    %447 = vmatmul.f32.gmra.mxu0 %v335
    %v448 = vpop.f32.mrf.mxu0
    %v449 = vadd.f32 %v426, %v448
    %450 = vmatmul.f32.gmra.mxu0 %v337
    %v451 = vpop.f32.mrf.mxu0
    %v452 = vadd.f32 %v429, %v451
    %453 = vdwg.mxu0
    %454 = vmatpush.msra.mxu0 %v369
    %455 = vmatpush.msra.mxu0 %v367
    %456 = vmatpush.msra.mxu0 %v365
    %457 = vmatpush.msra.mxu0 %v363
    %458 = vmatpush.msra.mxu0 %v361
    %459 = vmatpush.msra.mxu0 %v359
    %460 = vmatpush.msra.mxu0 %v357
    %461 = vmatpush.msra.mxu0 %v355
    %462 = vmatpush.msra.mxu0 %v353
    %463 = vmatpush.msra.mxu0 %v351
    %464 = vmatpush.msra.mxu0 %v349
    %465 = vmatpush.msra.mxu0 %v347
    %466 = vmatpush.msra.mxu0 %v345
    %467 = vmatpush.msra.mxu0 %v343
    %468 = vmatpush.msra.mxu0 %v341
    %469 = vmatpush.msra.mxu0 %v339
    %470 = vmatmul.f32.gmra.mxu0 %v334
    %v471 = vpop.f32.mrf.mxu0
    %v472 = vadd.f32 %v405, %v471
    %473 = vmatmul.f32.gmra.mxu0 %v336
    %v474 = vpop.f32.mrf.mxu0
    %v475 = vadd.f32 %v405, %v474
    %476 = vdwg.mxu0
    %477 = vmatpush.msra.mxu0 %v401
    %478 = vmatpush.msra.mxu0 %v399
    %479 = vmatpush.msra.mxu0 %v397
    %480 = vmatpush.msra.mxu0 %v395
    %481 = vmatpush.msra.mxu0 %v393
    %482 = vmatpush.msra.mxu0 %v391
    %483 = vmatpush.msra.mxu0 %v389
    %484 = vmatpush.msra.mxu0 %v387
    %485 = vmatpush.msra.mxu0 %v385
    %486 = vmatpush.msra.mxu0 %v383
    %487 = vmatpush.msra.mxu0 %v381
    %488 = vmatpush.msra.mxu0 %v379
    %489 = vmatpush.msra.mxu0 %v377
    %490 = vmatpush.msra.mxu0 %v375
    %491 = vmatpush.msra.mxu0 %v373
    %492 = vmatpush.msra.mxu0 %v371
    %493 = vmatmul.f32.gmra.mxu0 %v335
    %v494 = vpop.f32.mrf.mxu0
    %v495 = vadd.f32 %v472, %v494
    %496 = vmatmul.f32.gmra.mxu0 %v337
    %v497 = vpop.f32.mrf.mxu0
    %v498 = vadd.f32 %v475, %v497
    %499 = vdwg.mxu0
    %v500 = vmax.f32 %v449, 0.0
    %v501 = vmax.f32 %v495, 0.0
    %v502 = vmax.f32 %v452, 0.0
    %v503 = vmax.f32 %v498, 0.0
    %504 = vst [vmem:[#allocation11] sm:$0xff] %v500
    %505 = vst [vmem:[#allocation11 + $0x8] sm:$0xff] %v501
    %506 = vst [vmem:[#allocation11 + $0x10] sm:$0xff] %v502
    %507 = vst [vmem:[#allocation11 + $0x18] sm:$0xff] %v503
    // Predicated region
    $region50: #{tpu_custom_call.1} parent=1 // pred_check
      _
    $region51: #{tpu_custom_call.1} parent=1 // pred_check_branch
      %509 = sbr.rel (0) target = $region53
    $region52: #{tpu_custom_call.1} parent=1 // pred_region
      %511 = vsyncadd [#allocation4], 0
      %s512 = sshll.u32 [#allocation11], 4
      %s513 = int_to_ptr.vmem [resolvable:$true] %s512
      %s514 = sshll.u32 %s7, 4
      %s515 = int_to_ptr.hbm [resolvable:$true] %s514
      %520 = dma.vmem_to_hbm [thread:$0]  %s513, 512, %s515, [#allocation4], 256, 256, 16
    $region53: #{tpu_custom_call.1} parent=1 // pred_fallthru
      _
    // Predicated region
    $region54: #{tpu_custom_call.1} parent=1 // pred_check
      _
    $region55: #{tpu_custom_call.1} parent=1 // pred_check_branch
      %522 = sbr.rel (0) target = $region57
    $region56: #{tpu_custom_call.1} parent=1 // pred_region
      %524 = dma.done [#allocation4], 512
    $region57: #{tpu_custom_call.1} parent=1 // pred_fallthru
      _
    %525 = vsyncpa [#allocation3], 1
    %526 = vsyncpa [#allocation6], 1
    %527 = vsyncpa [#allocation9], 1
    %528 = vsyncpa [#allocation4], 1

</llo_original>
